<compile_context>
chip_gen: v7x
topology: tpu7x:2x2x1
jax: 0.10.0
libtpu: 0.0.40
codegen_flags: <defaults>
</compile_context>

<pallas_src>
import jax
import jax.numpy as jnp
from jax.experimental import pallas as pl
from jax.experimental.pallas import tpu as pltpu

_EPS = 1e-5  # PyTorch nn.LayerNorm default eps


def _fused_kernel(x_ref, gamma_ref, beta_ref, qk_ref, mask_ref, v_ref, o_ref):
    # Grid point = (batch b, query-row tile q). Leading block dim is 1.
    x = x_ref[0].astype(jnp.float32)            # (tq, D)
    gamma = gamma_ref[...].astype(jnp.float32)  # (1, D), broadcasts over rows
    beta = beta_ref[...].astype(jnp.float32)    # (1, D)

    # ---- LayerNorm over last dim (biased variance, like torch.nn.LayerNorm) ----
    mean = jnp.mean(x, axis=-1, keepdims=True)
    xc = x - mean
    var = jnp.mean(xc * xc, axis=-1, keepdims=True)
    x_norm = xc * jax.lax.rsqrt(var + _EPS) * gamma + beta            # (tq, D)

    # ---- masked softmax over last dim (stats in f32) ----
    # mask block is (1, 1, S) -> mask_ref[0] is (1, S); broadcast add on the VPU.
    logits = qk_ref[0].astype(jnp.float32) + mask_ref[0].astype(jnp.float32)  # (tq, S)
    m = jnp.max(logits, axis=-1, keepdims=True)
    e = jnp.exp(logits - m)                                           # unnormalized probs
    denom = jnp.sum(e, axis=-1, keepdims=True)                        # (tq, 1)

    # ---- (unnormalized probs) @ v on the MXU, then scale by 1/denom ----
    q = jnp.dot(e.astype(v_ref.dtype), v_ref[0],
                preferred_element_type=jnp.float32)                   # (tq, D)
    # Exact f32 reciprocal: only tq divides, and it keeps bit-level parity with
    # the reference softmax (the approx EUP reciprocal failed the tolerance).
    q = q * (1.0 / denom)

    o_ref[0] = (x_norm + q).astype(o_ref.dtype)


def _vmem_budget_bytes():
    """Per-generation VMEM budget with headroom (96 MiB on v5e/v6e, 48 MiB on v7x)."""
    try:
        cap = int(pltpu.get_tpu_info().vmem_capacity_bytes)
    except Exception:
        cap = 64 * 1024 * 1024  # assume the smallest generation (v7x/TC) if unknown
    return int(cap * 0.75)


def _legal_tqs(S):
    # Legal second-to-last block dims: multiples of 8 that divide S, or S itself.
    legal = {S}
    for d in range(8, S + 1, 8):
        if S % d == 0:
            legal.add(d)
    return sorted(legal)


def _pick_tq(B, S, D, qk_bytes, x_bytes, v_bytes, out_bytes, budget_bytes):
    """Largest legal query tile whose VMEM footprint fits the budget."""
    # Fixed (per grid step, independent of tq):
    #   v block   : 2 * S * D * v_bytes   (resident across q tiles, default 2 buffers)
    #              (a further v7x tweak is pipeline_mode=pl.Buffered(1) on v to
    #               reclaim one buffer; omitted here for portability)
    #   mask      : 2 * S * qk_bytes
    #   gamma/beta: ~4 * D * 4
    fixed = 2 * S * D * v_bytes + 2 * S * qk_bytes + 4 * D * 4
    # Per query row:
    #   qk tile (double-buffered)        : 2 * S * qk_bytes
    #   in-kernel f32 logits + exp temps : 2 * S * 4
    #   x tile + out tile (double-buffered)
    per_row = 2 * S * qk_bytes + 2 * S * 4 + 2 * D * x_bytes + 2 * D * out_bytes
    avail = int(budget_bytes * 0.85) - fixed
    max_tq = max(1, avail // per_row) if avail > 0 else 1

    legal = _legal_tqs(S)
    fits = [t for t in legal if t <= max_tq]
    tq = max(fits) if fits else min(legal)

    # v7x megacore: if B == 1 and a single tile covers all rows, split the q axis
    # (when a legal smaller tile exists) so both TensorCores get grid work.
    if B == 1 and tq == S:
        smaller = [t for t in legal if t < S and t <= max_tq]
        if smaller:
            tq = max(smaller)
    return tq


def model_forward(x, gamma, beta, qk, mask, v):
    B, S, D = x.shape
    assert qk.shape == (B, S, S)
    assert v.shape == (B, S, D)

    mask = jnp.asarray(mask)
    # The kernel broadcasts one additive mask row over every query row.
    # A per-row / causal (B, S, S) mask would need a (1, tq, S) mask spec instead.
    assert mask.ndim < 2 or mask.shape[-2] == 1, "mask must be query-row broadcastable"
    mask_b = jnp.broadcast_to(mask, (B, 1, S)).astype(qk.dtype)

    gamma2 = jnp.asarray(gamma).reshape(1, D)
    beta2 = jnp.asarray(beta).reshape(1, D)

    budget = _vmem_budget_bytes()
    tq = _pick_tq(
        B, S, D,
        qk_bytes=jnp.dtype(qk.dtype).itemsize,
        x_bytes=jnp.dtype(x.dtype).itemsize,
        v_bytes=jnp.dtype(v.dtype).itemsize,
        out_bytes=jnp.dtype(x.dtype).itemsize,
        budget_bytes=budget,
    )
    grid = (B, S // tq)

    # TODO(synk): if this is per-head attention with D < 128, fold heads so the
    # x/v/out last dim is lane-dense (>=128) and stores avoid masked vst.msk.
    return pl.pallas_call(
        _fused_kernel,
        out_shape=jax.ShapeDtypeStruct((B, S, D), x.dtype),
        grid=grid,
        in_specs=[
            pl.BlockSpec((1, tq, D), lambda b, q: (b, q, 0)),   # x
            pl.BlockSpec((1, D), lambda b, q: (0, 0)),          # gamma
            pl.BlockSpec((1, D), lambda b, q: (0, 0)),          # beta
            pl.BlockSpec((1, tq, S), lambda b, q: (b, q, 0)),   # qk (streamed)
            pl.BlockSpec((1, 1, S), lambda b, q: (b, 0, 0)),    # mask (broadcast in-kernel)
            pl.BlockSpec((1, S, D), lambda b, q: (b, 0, 0)),    # v (resident across q tiles)
        ],
        out_specs=pl.BlockSpec((1, tq, D), lambda b, q: (b, q, 0)),
        compiler_params=pltpu.CompilerParams(
            dimension_semantics=("parallel", "parallel"),
            vmem_limit_bytes=budget,
        ),
    )(x, gamma2, beta2, qk, mask_b, v)


def _reference(x, gamma, beta, qk, mask, v):
    mean = jnp.mean(x, axis=-1, keepdims=True)
    var = jnp.mean((x - mean) ** 2, axis=-1, keepdims=True)
    x_norm = (x - mean) * jax.lax.rsqrt(var + _EPS) * gamma + beta
    attn = jax.nn.softmax(qk + mask, axis=-1)
    q = jnp.einsum("bqk,bkd->bqd", attn, v)
    return x_norm + q


if __name__ == "__main__":
    B, S, D = 2, 8, 32
    key = jax.random.PRNGKey(0)
    kx, kqk, kmask, kv = jax.random.split(key, 4)

    x = jax.random.normal(kx, (B, S, D), dtype=jnp.float32)
    qk = jax.random.normal(kqk, (B, S, S), dtype=jnp.float32)
    # additive attention mask, broadcast over query rows
    mask = jnp.where(jax.random.uniform(kmask, (B, 1, S)) > 0.5, 0.0, -1e9).astype(jnp.float32)
    v = jax.random.normal(kv, (B, S, D), dtype=jnp.float32)

    # Deterministic LayerNorm params (PyTorch default init: weight=1, bias=0).
    gamma = jnp.ones((D,), dtype=jnp.float32)
    beta = jnp.zeros((D,), dtype=jnp.float32)

    out = model_forward(x, gamma, beta, qk, mask, v)
    out = jax.block_until_ready(out)

    ref = _reference(x, gamma, beta, qk, mask, v)
    assert out.shape == (B, S, D)
    assert jnp.allclose(out, ref, atol=2e-3, rtol=2e-3), "mismatch vs reference"

    print("KERNEL_OK")
</pallas_src>

<mosaic_0001>
module attributes {stable_mosaic.version = 11 : i64} {
  func.func @_fused_kernel(%arg0: i32, %arg1: i32, %arg2: memref<1x8x32xf32, #tpu.memory_space<vmem>>, %arg3: memref<1x32xf32, #tpu.memory_space<vmem>>, %arg4: memref<1x32xf32, #tpu.memory_space<vmem>>, %arg5: memref<1x8x8xf32, #tpu.memory_space<vmem>>, %arg6: memref<1x1x8xf32, #tpu.memory_space<vmem>>, %arg7: memref<1x8x32xf32, #tpu.memory_space<vmem>>, %arg8: memref<1x8x32xf32, #tpu.memory_space<vmem>>) attributes {dimension_semantics = [#tpu.dimension_semantics<parallel>, #tpu.dimension_semantics<parallel>], iteration_bounds = array<i64: 2, 1>, scalar_prefetch = 0 : i64, scratch_operands = 0 : i64, tpu.core_type = #tpu.core_type<tc>, window_params = [{transform_indices = @transform_0, window_bounds = array<i64: 1, 8, 32>}, {pipeline_mode = #tpu.pipeline_mode<synchronous>, transform_indices = @transform_1, window_bounds = array<i64: 1, 32>}, {pipeline_mode = #tpu.pipeline_mode<synchronous>, transform_indices = @transform_2, window_bounds = array<i64: 1, 32>}, {transform_indices = @transform_3, window_bounds = array<i64: 1, 8, 8>}, {transform_indices = @transform_4, window_bounds = array<i64: 1, 1, 8>}, {transform_indices = @transform_5, window_bounds = array<i64: 1, 8, 32>}, {transform_indices = @transform_6, window_bounds = array<i64: 1, 8, 32>}]} {
    %c0 = arith.constant 0 : index
    %c0_0 = arith.constant 0 : index
    %c0_1 = arith.constant 0 : index
    %0 = vector.load %arg2[%c0, %c0_0, %c0_1] : memref<1x8x32xf32, #tpu.memory_space<vmem>>, vector<1x8x32xf32>
    %1 = vector.shape_cast %0 : vector<1x8x32xf32> to vector<8x32xf32>
    %c0_2 = arith.constant 0 : index
    %c0_3 = arith.constant 0 : index
    %2 = vector.load %arg3[%c0_2, %c0_3] : memref<1x32xf32, #tpu.memory_space<vmem>>, vector<1x32xf32>
    %c0_4 = arith.constant 0 : index
    %c0_5 = arith.constant 0 : index
    %3 = vector.load %arg4[%c0_4, %c0_5] : memref<1x32xf32, #tpu.memory_space<vmem>>, vector<1x32xf32>
    %cst = arith.constant dense<0.000000e+00> : vector<8xf32>
    %4 = vector.multi_reduction <add>, %1, %cst [1] : vector<8x32xf32> to vector<8xf32>
    %5 = vector.shape_cast %4 : vector<8xf32> to vector<8x1xf32>
    %cst_6 = arith.constant 3.200000e+01 : f32
    %6 = vector.broadcast %cst_6 : f32 to vector<8x1xf32>
    %7 = arith.divf %5, %6 : vector<8x1xf32>
    %8 = vector.broadcast %7 : vector<8x1xf32> to vector<8x32xf32>
    %9 = arith.subf %1, %8 : vector<8x32xf32>
    %10 = arith.mulf %9, %9 : vector<8x32xf32>
    %cst_7 = arith.constant dense<0.000000e+00> : vector<8xf32>
    %11 = vector.multi_reduction <add>, %10, %cst_7 [1] : vector<8x32xf32> to vector<8xf32>
    %12 = vector.shape_cast %11 : vector<8xf32> to vector<8x1xf32>
    %cst_8 = arith.constant 3.200000e+01 : f32
    %13 = vector.broadcast %cst_8 : f32 to vector<8x1xf32>
    %14 = arith.divf %12, %13 : vector<8x1xf32>
    %cst_9 = arith.constant 9.99999974E-6 : f32
    %15 = vector.broadcast %cst_9 : f32 to vector<8x1xf32>
    %16 = arith.addf %14, %15 : vector<8x1xf32>
    %17 = math.rsqrt %16 : vector<8x1xf32>
    %18 = vector.broadcast %17 : vector<8x1xf32> to vector<8x32xf32>
    %19 = arith.mulf %9, %18 : vector<8x32xf32>
    %20 = vector.broadcast %2 : vector<1x32xf32> to vector<8x32xf32>
    %21 = arith.mulf %19, %20 : vector<8x32xf32>
    %22 = vector.broadcast %3 : vector<1x32xf32> to vector<8x32xf32>
    %23 = arith.addf %21, %22 : vector<8x32xf32>
    %c0_10 = arith.constant 0 : index
    %c0_11 = arith.constant 0 : index
    %c0_12 = arith.constant 0 : index
    %24 = vector.load %arg5[%c0_10, %c0_11, %c0_12] : memref<1x8x8xf32, #tpu.memory_space<vmem>>, vector<1x8x8xf32>
    %25 = vector.shape_cast %24 : vector<1x8x8xf32> to vector<8x8xf32>
    %c0_13 = arith.constant 0 : index
    %c0_14 = arith.constant 0 : index
    %c0_15 = arith.constant 0 : index
    %26 = vector.load %arg6[%c0_13, %c0_14, %c0_15] : memref<1x1x8xf32, #tpu.memory_space<vmem>>, vector<1x1x8xf32>
    %27 = vector.shape_cast %26 : vector<1x1x8xf32> to vector<1x8xf32>
    %28 = vector.broadcast %27 : vector<1x8xf32> to vector<8x8xf32>
    %29 = arith.addf %25, %28 : vector<8x8xf32>
    %cst_16 = arith.constant dense<0xFF800000> : vector<8xf32>
    %30 = vector.multi_reduction <maximumf>, %29, %cst_16 [1] : vector<8x8xf32> to vector<8xf32>
    %31 = vector.shape_cast %30 : vector<8xf32> to vector<8x1xf32>
    %32 = vector.broadcast %31 : vector<8x1xf32> to vector<8x8xf32>
    %33 = arith.subf %29, %32 : vector<8x8xf32>
    %34 = math.exp %33 : vector<8x8xf32>
    %cst_17 = arith.constant dense<0.000000e+00> : vector<8xf32>
    %35 = vector.multi_reduction <add>, %34, %cst_17 [1] : vector<8x8xf32> to vector<8xf32>
    %36 = vector.shape_cast %35 : vector<8xf32> to vector<8x1xf32>
    %c0_18 = arith.constant 0 : index
    %c0_19 = arith.constant 0 : index
    %c0_20 = arith.constant 0 : index
    %37 = vector.load %arg7[%c0_18, %c0_19, %c0_20] : memref<1x8x32xf32, #tpu.memory_space<vmem>>, vector<1x8x32xf32>
    %38 = vector.shape_cast %37 : vector<1x8x32xf32> to vector<8x32xf32>
    %cst_21 = arith.constant dense<0.000000e+00> : vector<8x32xf32>
    %39 = tpu.matmul %34, %38, %cst_21 {dimension_numbers = #tpu.dot_dimension_numbers<[1], [0], [0], [1], [0, 0, 1, 1], [], []>} : vector<8x8xf32>, vector<8x32xf32>, vector<8x32xf32> -> vector<8x32xf32>
    %cst_22 = arith.constant 1.000000e+00 : f32
    %40 = vector.broadcast %cst_22 : f32 to vector<8x1xf32>
    %41 = arith.divf %40, %36 : vector<8x1xf32>
    %42 = vector.broadcast %41 : vector<8x1xf32> to vector<8x32xf32>
    %43 = arith.mulf %39, %42 : vector<8x32xf32>
    %44 = arith.addf %23, %43 : vector<8x32xf32>
    %c0_23 = arith.constant 0 : index
    %c0_24 = arith.constant 0 : index
    %c0_25 = arith.constant 0 : index
    %45 = vector.load %arg8[%c0_23, %c0_24, %c0_25] : memref<1x8x32xf32, #tpu.memory_space<vmem>>, vector<1x8x32xf32>
    %46 = vector.shape_cast %45 : vector<1x8x32xf32> to vector<8x32xf32>
    %47 = vector.shape_cast %44 : vector<8x32xf32> to vector<1x8x32xf32>
    tpu.vector_store %arg8[%c0_23, %c0_24, %c0_25], %47 {strides = array<i32>} : memref<1x8x32xf32, #tpu.memory_space<vmem>>, vector<1x8x32xf32>,
    return
  }
  func.func @transform_0(%arg0: i32, %arg1: i32) -> (i32, i32, i32) {
    %c0_i32 = arith.constant 0 : i32
    %c0_i32_0 = arith.constant 0 : i32
    return %arg0, %arg1, %c0_i32 : i32, i32, i32
  }
  func.func @transform_1(%arg0: i32, %arg1: i32) -> (i32, i32) {
    %c0_i32 = arith.constant 0 : i32
    %c0_i32_0 = arith.constant 0 : i32
    %c0_i32_1 = arith.constant 0 : i32
    return %c0_i32, %c0_i32_0 : i32, i32
  }
  func.func @transform_2(%arg0: i32, %arg1: i32) -> (i32, i32) {
    %c0_i32 = arith.constant 0 : i32
    %c0_i32_0 = arith.constant 0 : i32
    %c0_i32_1 = arith.constant 0 : i32
    return %c0_i32, %c0_i32_0 : i32, i32
  }
  func.func @transform_3(%arg0: i32, %arg1: i32) -> (i32, i32, i32) {
    %c0_i32 = arith.constant 0 : i32
    %c0_i32_0 = arith.constant 0 : i32
    return %arg0, %arg1, %c0_i32 : i32, i32, i32
  }
  func.func @transform_4(%arg0: i32, %arg1: i32) -> (i32, i32, i32) {
    %c0_i32 = arith.constant 0 : i32
    %c0_i32_0 = arith.constant 0 : i32
    %c0_i32_1 = arith.constant 0 : i32
    return %arg0, %c0_i32, %c0_i32_0 : i32, i32, i32
  }
  func.func @transform_5(%arg0: i32, %arg1: i32) -> (i32, i32, i32) {
    %c0_i32 = arith.constant 0 : i32
    %c0_i32_0 = arith.constant 0 : i32
    %c0_i32_1 = arith.constant 0 : i32
    return %arg0, %c0_i32, %c0_i32_0 : i32, i32, i32
  }
  func.func @transform_6(%arg0: i32, %arg1: i32) -> (i32, i32, i32) {
    %c0_i32 = arith.constant 0 : i32
    %c0_i32_0 = arith.constant 0 : i32
    return %arg0, %arg1, %c0_i32 : i32, i32, i32
  }
}

</mosaic_0001>

<llo_original>
// kernel: tpu_custom_call.1
$region0: #{tpu_custom_call.1}
  #allocation0 [shape = 'u32[]', space=smem, size = 0x4, offset = 0x4, fixed_abs, tag = 'smem constant byte address 0x4 - core index']
  #allocation1 [shape = 'u32[144,128]{1,0:T(1,128)}', space=vmem, size = 0x12000, scoped, tag = 'internal scratch']
  %s0 = inlined_call_operand.hbm [shape: f32[2,8,32], index: 0, kind: input, shape index: {}]
  %s1 = inlined_call_operand.hbm [shape: f32[1,32], index: 1, kind: input, shape index: {}]
  %s2 = inlined_call_operand.hbm [shape: f32[1,32], index: 2, kind: input, shape index: {}]
  %s3 = inlined_call_operand.hbm [shape: f32[2,8,8], index: 3, kind: input, shape index: {}]
  %s4 = inlined_call_operand.vmem [shape: f32[2,1,8], index: 4, kind: input, shape index: {}]
  %s5 = inlined_call_operand.vmem [shape: f32[2,8,32], index: 5, kind: input, shape index: {}]
  %s6 = inlined_call_operand.hbm [shape: f32[2,8,32], index: 6, kind: output, shape index: {}]
  %s7 = sld [smem:[#allocation0]]
  $region73: #{tpu_custom_call.1} parent=0
    _
  %s9 = ssub.s32 1, %s7
  %s10 = scalar_select 0, %s9, %s7
  $region1: #{tpu_custom_call.1} parent=0
    #allocation2 [shape = 'u8[8192]{0}', space=vmem, size = 0x2000, scoped, tag = 'input window, operand 0']
    #allocation3 [shape = 's32[2]{0}', space=sflag, size = 0x8, scoped, tag = 'scoped memory for tpu_custom_call.1']
    #allocation4 [shape = 's32[2]{0}', space=sflag, size = 0x8, scoped, tag = 'scoped memory for tpu_custom_call.1']
    #allocation5 [shape = 'u8[512]{0}', space=vmem, size = 0x400, scoped, tag = 'input window, operand 1, single buffered']
    #allocation6 [shape = 's32[1]{0}', space=sflag, size = 0x4, scoped, tag = 'scoped memory for tpu_custom_call.1']
    #allocation7 [shape = 'u8[512]{0}', space=vmem, size = 0x400, scoped, tag = 'input window, operand 2, single buffered']
    #allocation8 [shape = 'u8[8192]{0}', space=vmem, size = 0x2000, scoped, tag = 'input window, operand 3']
    #allocation9 [shape = 's32[2]{0}', space=sflag, size = 0x8, scoped, tag = 'scoped memory for tpu_custom_call.1']
    #allocation10 [shape = 'u8[8192]{0}', space=vmem, size = 0x2000, scoped, tag = 'output window, operand 0']
    %11 = vsyncpa [#allocation3], 0
    %s12 = scalar_lea.sflag [#allocation3], 1
    %13 = vsyncpa %s12, 0
    %14 = vsyncpa [#allocation6], 0
    %15 = vsyncpa [#allocation9], 0
    %s16 = scalar_lea.sflag [#allocation9], 1
    %17 = vsyncpa %s16, 0
    %18 = vsyncpa [#allocation4], 0
    %s19 = scalar_lea.sflag [#allocation4], 1
    %20 = vsyncpa %s19, 0
    loop: start=0, step=1, limit=4
    $region2: #{tpu_custom_call.1} parent=1 // loop_pre_header
      _
    $region3: #{tpu_custom_call.1} parent=1 // loop_header
      %s22 = sphi 0, %s26
      %p23 = scmp.ge.s32.totalorder %s22, 4
      %s29 = sphi 0, %s41
      %s30 = sphi 0, %s37
      %s31 = sphi 0, %s29
      %s32 = sphi 0, %s30
      %s33 = sphi 0, %s31
      %s34 = sphi 0, %s32
      %s46 = sphi 0, %s48
      %s49 = sphi 0, %s46
      %s50 = sphi 0, %s49
      %s66 = sphi 0, %s50
      %s70 = sphi 0, %s70
      %s72 = sphi 0, %s70
      %s73 = sphi 0, %s72
      %s87 = sphi 0, %s73
      %s91 = sphi 0, %s91
      %s93 = sphi 0, %s91
      %s94 = sphi 0, %s93
      %s108 = sphi 0, %s94
      %s116 = sphi 0, %s118
      %s119 = sphi 0, %s116
      %s120 = sphi 0, %s119
      %s136 = sphi 0, %s120
      %s142 = sphi 0, %s144
      %s145 = sphi 0, %s142
      %s146 = sphi 0, %s145
      %s162 = sphi 0, %s146
      %s168 = sphi 0, %s170
      %s171 = sphi 0, %s168
      %s172 = sphi 0, %s171
      %s188 = sphi 0, %s172
      %s196 = sphi 0, %s198
      %s199 = sphi 0, %s196
      %s200 = sphi 0, %s199
      %s216 = sphi 0, %s200
    $region4: #{tpu_custom_call.1} parent=1 // loop_header_branch
      %25 = sbr.rel (%p23) target = $region8
    $region5: #{tpu_custom_call.1} parent=1 // loop_body
      %s27 = ssub.s32 %s22, 1
      %s28 = ssub.s32 %s22, 2
      %s35 = sadd.s32 1, %s30
      %p36 = scmp.ge.s32.totalorder %s35, 1
      %s37 = scalar_select %p36, 0, %s35
      %s38 = sadd.s32 1, %s29
      %s39 = scalar_select %p36, %s38, %s29
      %p40 = scmp.ge.s32.totalorder %s39, 2
      %s41 = scalar_select %p40, 0, %s39
      %s42 = ssub.s32 %s29, %s41
      %s43 = ssub.s32 %s30, %s37
      %s44 = sor.u32 %s42, %s43
      %p45 = scmp.eq.s32.totalorder %s44, 0
      %s47 = sadd.s32 %s46, 1
      %s48 = scalar_select %p45, %s46, %s47
      %p51 = pneg %p45
      %p52 = scmp.eq.s32.totalorder %s22, 1
      %p53 = por %p51, %p52
      %p54 = scmp.ne.s32.totalorder %s46, %s49
      %p55 = scmp.eq.s32.totalorder %s22, 0
      %p56 = por %p54, %p55
      %p57 = scmp.ne.s32.totalorder %s46, %s49
      %p58 = scmp.eq.s32.totalorder %s27, 1
      %p59 = por %p57, %p58
      %p60 = scmp.ne.s32.totalorder %s49, %s50
      %p61 = scmp.eq.s32.totalorder %s27, 0
      %p62 = por %p60, %p61
      %p63 = scmp.ne.s32.totalorder %s49, %s50
      %p64 = scmp.eq.s32.totalorder %s28, 1
      %p65 = por %p63, %p64
      %p67 = scmp.ne.s32.totalorder %s50, %s66
      %p68 = scmp.eq.s32.totalorder %s28, 0
      %p69 = por %p67, %p68
      %s71 = sadd.s32 %s70, 1
      %p74 = scmp.eq.s32.totalorder %s22, 1
      %p75 = scmp.ne.s32.totalorder %s70, %s72
      %p76 = scmp.eq.s32.totalorder %s22, 0
      %p77 = por %p75, %p76
      %p78 = scmp.ne.s32.totalorder %s70, %s72
      %p79 = scmp.eq.s32.totalorder %s27, 1
      %p80 = por %p78, %p79
      %p81 = scmp.ne.s32.totalorder %s72, %s73
      %p82 = scmp.eq.s32.totalorder %s27, 0
      %p83 = por %p81, %p82
      %p84 = scmp.ne.s32.totalorder %s72, %s73
      %p85 = scmp.eq.s32.totalorder %s28, 1
      %p86 = por %p84, %p85
      %p88 = scmp.ne.s32.totalorder %s73, %s87
      %p89 = scmp.eq.s32.totalorder %s28, 0
      %p90 = por %p88, %p89
      %s92 = sadd.s32 %s91, 1
      %p95 = scmp.eq.s32.totalorder %s22, 1
      %p96 = scmp.ne.s32.totalorder %s91, %s93
      %p97 = scmp.eq.s32.totalorder %s22, 0
      %p98 = por %p96, %p97
      %p99 = scmp.ne.s32.totalorder %s91, %s93
      %p100 = scmp.eq.s32.totalorder %s27, 1
      %p101 = por %p99, %p100
      %p102 = scmp.ne.s32.totalorder %s93, %s94
      %p103 = scmp.eq.s32.totalorder %s27, 0
      %p104 = por %p102, %p103
      %p105 = scmp.ne.s32.totalorder %s93, %s94
      %p106 = scmp.eq.s32.totalorder %s28, 1
      %p107 = por %p105, %p106
      %p109 = scmp.ne.s32.totalorder %s94, %s108
      %p110 = scmp.eq.s32.totalorder %s28, 0
      %p111 = por %p109, %p110
      %s112 = ssub.s32 %s29, %s41
      %s113 = ssub.s32 %s30, %s37
      %s114 = sor.u32 %s112, %s113
      %p115 = scmp.eq.s32.totalorder %s114, 0
      %s117 = sadd.s32 %s116, 1
      %s118 = scalar_select %p115, %s116, %s117
      %p121 = pneg %p115
      %p122 = scmp.eq.s32.totalorder %s22, 1
      %p123 = por %p121, %p122
      %p124 = scmp.ne.s32.totalorder %s116, %s119
      %p125 = scmp.eq.s32.totalorder %s22, 0
      %p126 = por %p124, %p125
      %p127 = scmp.ne.s32.totalorder %s116, %s119
      %p128 = scmp.eq.s32.totalorder %s27, 1
      %p129 = por %p127, %p128
      %p130 = scmp.ne.s32.totalorder %s119, %s120
      %p131 = scmp.eq.s32.totalorder %s27, 0
      %p132 = por %p130, %p131
      %p133 = scmp.ne.s32.totalorder %s119, %s120
      %p134 = scmp.eq.s32.totalorder %s28, 1
      %p135 = por %p133, %p134
      %p137 = scmp.ne.s32.totalorder %s120, %s136
      %p138 = scmp.eq.s32.totalorder %s28, 0
      %p139 = por %p137, %p138
      %s140 = ssub.s32 %s29, %s41
      %p141 = scmp.eq.s32.totalorder %s140, 0
      %s143 = sadd.s32 %s142, 1
      %s144 = scalar_select %p141, %s142, %s143
      %p147 = pneg %p141
      %p148 = scmp.eq.s32.totalorder %s22, 1
      %p149 = por %p147, %p148
      %p150 = scmp.ne.s32.totalorder %s142, %s145
      %p151 = scmp.eq.s32.totalorder %s22, 0
      %p152 = por %p150, %p151
      %p153 = scmp.ne.s32.totalorder %s142, %s145
      %p154 = scmp.eq.s32.totalorder %s27, 1
      %p155 = por %p153, %p154
      %p156 = scmp.ne.s32.totalorder %s145, %s146
      %p157 = scmp.eq.s32.totalorder %s27, 0
      %p158 = por %p156, %p157
      %p159 = scmp.ne.s32.totalorder %s145, %s146
      %p160 = scmp.eq.s32.totalorder %s28, 1
      %p161 = por %p159, %p160
      %p163 = scmp.ne.s32.totalorder %s146, %s162
      %p164 = scmp.eq.s32.totalorder %s28, 0
      %p165 = por %p163, %p164
      %s166 = ssub.s32 %s29, %s41
      %p167 = scmp.eq.s32.totalorder %s166, 0
      %s169 = sadd.s32 %s168, 1
      %s170 = scalar_select %p167, %s168, %s169
      %p173 = pneg %p167
      %p174 = scmp.eq.s32.totalorder %s22, 1
      %p175 = por %p173, %p174
      %p176 = scmp.ne.s32.totalorder %s168, %s171
      %p177 = scmp.eq.s32.totalorder %s22, 0
      %p178 = por %p176, %p177
      %p179 = scmp.ne.s32.totalorder %s168, %s171
      %p180 = scmp.eq.s32.totalorder %s27, 1
      %p181 = por %p179, %p180
      %p182 = scmp.ne.s32.totalorder %s171, %s172
      %p183 = scmp.eq.s32.totalorder %s27, 0
      %p184 = por %p182, %p183
      %p185 = scmp.ne.s32.totalorder %s171, %s172
      %p186 = scmp.eq.s32.totalorder %s28, 1
      %p187 = por %p185, %p186
      %p189 = scmp.ne.s32.totalorder %s172, %s188
      %p190 = scmp.eq.s32.totalorder %s28, 0
      %p191 = por %p189, %p190
      %s192 = ssub.s32 %s29, %s41
      %s193 = ssub.s32 %s30, %s37
      %s194 = sor.u32 %s192, %s193
      %p195 = scmp.eq.s32.totalorder %s194, 0
      %s197 = sadd.s32 %s196, 1
      %s198 = scalar_select %p195, %s196, %s197
      %p201 = pneg %p195
      %p202 = scmp.eq.s32.totalorder %s22, 1
      %p203 = por %p201, %p202
      %p204 = scmp.ne.s32.totalorder %s196, %s199
      %p205 = scmp.eq.s32.totalorder %s22, 0
      %p206 = por %p204, %p205
      %p207 = scmp.ne.s32.totalorder %s196, %s199
      %p208 = scmp.eq.s32.totalorder %s27, 1
      %p209 = por %p207, %p208
      %p210 = scmp.ne.s32.totalorder %s199, %s200
      %p211 = scmp.eq.s32.totalorder %s27, 0
      %p212 = por %p210, %p211
      %p213 = scmp.ne.s32.totalorder %s199, %s200
      %p214 = scmp.eq.s32.totalorder %s28, 1
      %p215 = por %p213, %p214
      %p217 = scmp.ne.s32.totalorder %s200, %s216
      %p218 = scmp.eq.s32.totalorder %s28, 0
      %p219 = por %p217, %p218
      %p220 = scmp.le.s32.totalorder 1, %s22
      %p221 = scmp.lt.s32.totalorder %s22, 3
      %p222 = pnand %p220, %p221
      %p223 = pneg %p222
      // Predicated region
      $region9: #{tpu_custom_call.1} parent=5 // pred_check
        _
      $region10: #{tpu_custom_call.1} parent=5 // pred_check_branch
        %225 = sbr.rel (%p222) target = $region12
      $region11: #{tpu_custom_call.1} parent=5 // pred_region
        %s226 = ssub.s32 %s22, 1
        // Predicated region
        $region13: #{tpu_custom_call.1} parent=11 // pred_check
          %p227 = pneg %p83
        $region14: #{tpu_custom_call.1} parent=11 // pred_check_branch
          %229 = sbr.rel (%p227) target = $region16
        $region15: #{tpu_custom_call.1} parent=11 // pred_region
          %s231 = ssub.s32 16, 16
          %232 = vsyncadd [#allocation6], %s231
          %s234 = sshll.u32 [#allocation5], 4
          %s235 = int_to_ptr.vmem [resolvable:$true] %s234
          %237 = dma.hbm_to_vmem [thread:$0]  %s1, 16, %s235, [#allocation6]
        $region16: #{tpu_custom_call.1} parent=11 // pred_fallthru
          _
        // Predicated region
        $region17: #{tpu_custom_call.1} parent=11 // pred_check
          %p238 = pneg %p104
        $region18: #{tpu_custom_call.1} parent=11 // pred_check_branch
          %240 = sbr.rel (%p238) target = $region20
        $region19: #{tpu_custom_call.1} parent=11 // pred_region
          %s242 = ssub.s32 16, 16
          %243 = vsyncadd [#allocation6], %s242
          %s245 = sshll.u32 [#allocation7], 4
          %s246 = int_to_ptr.vmem [resolvable:$true] %s245
          %248 = dma.hbm_to_vmem [thread:$0]  %s2, 16, %s246, [#allocation6]
        $region20: #{tpu_custom_call.1} parent=11 // pred_fallthru
          _
      $region12: #{tpu_custom_call.1} parent=5 // pred_fallthru
        _
      %p249 = scmp.lt.s32.totalorder %s22, 2
      // Predicated region
      $region21: #{tpu_custom_call.1} parent=5 // pred_check
        %p250 = pneg %p249
      $region22: #{tpu_custom_call.1} parent=5 // pred_check_branch
        %252 = sbr.rel (%p250) target = $region24
      $region23: #{tpu_custom_call.1} parent=5 // pred_region
        // Predicated region
        $region25: #{tpu_custom_call.1} parent=23 // pred_check
          %p253 = pneg %p56
        $region26: #{tpu_custom_call.1} parent=23 // pred_check_branch
          %255 = sbr.rel (%p253) target = $region28
        $region27: #{tpu_custom_call.1} parent=23 // pred_region
          %s256 = sand.u32 %s46, 1
          %s257 = scalar_lea.sflag [#allocation3], %s256
          %s258 = sand.u32 %s46, 1
          %s259 = smul.addr %s258, 8
          %s260 = scalar_lea.vmem [#allocation2], %s259
          %s262 = ssub.s32 128, 128
          %263 = vsyncadd %s257, %s262
          %s264 = sadd.s32 %s30, %s29
          %s265 = smul.addr %s264, 128
          %s266 = scalar_lea.hbm %s0, %s265
          %s268 = sshll.u32 %s260, 4
          %s269 = int_to_ptr.vmem [resolvable:$true] %s268
          %271 = dma.hbm_to_vmem [thread:$0]  %s266, 128, %s269, %s257
        $region28: #{tpu_custom_call.1} parent=23 // pred_fallthru
          _
        // Predicated region
        $region29: #{tpu_custom_call.1} parent=23 // pred_check
          %p272 = pneg %p126
        $region30: #{tpu_custom_call.1} parent=23 // pred_check_branch
          %274 = sbr.rel (%p272) target = $region32
        $region31: #{tpu_custom_call.1} parent=23 // pred_region
          %s275 = sand.u32 %s116, 1
          %s276 = scalar_lea.sflag [#allocation9], %s275
          %s277 = sand.u32 %s116, 1
          %s278 = smul.addr %s277, 8
          %s279 = scalar_lea.vmem [#allocation8], %s278
          %s281 = ssub.s32 128, 128
          %282 = vsyncadd %s276, %s281
          %s283 = sadd.s32 %s30, %s29
          %s284 = smul.addr %s283, 128
          %s285 = scalar_lea.hbm %s3, %s284
          %s287 = sshll.u32 %s279, 4
          %s288 = int_to_ptr.vmem [resolvable:$true] %s287
          %290 = dma.hbm_to_vmem [thread:$0]  %s285, 128, %s288, %s276
        $region32: #{tpu_custom_call.1} parent=23 // pred_fallthru
          _
        // Predicated region
        $region33: #{tpu_custom_call.1} parent=23 // pred_check
          %p291 = pneg %p152
        $region34: #{tpu_custom_call.1} parent=23 // pred_check_branch
          %293 = sbr.rel (%p291) target = $region36
        $region35: #{tpu_custom_call.1} parent=23 // pred_region
          %p294 = scmp.lt.s32.totalorder %s29, 1
          %s295 = scalar_select %p294, %s29, 1
          %s296 = scalar_lea.vmem %s4, %s295
        $region36: #{tpu_custom_call.1} parent=23 // pred_fallthru
          _
        // Predicated region
        $region37: #{tpu_custom_call.1} parent=23 // pred_check
          %p297 = pneg %p178
        $region38: #{tpu_custom_call.1} parent=23 // pred_check_branch
          %299 = sbr.rel (%p297) target = $region40
        $region39: #{tpu_custom_call.1} parent=23 // pred_region
          %p300 = scmp.lt.s32.totalorder %s29, 1
          %s301 = scalar_select %p300, %s29, 1
          %s302 = smul.addr %s301, 8
          %s303 = scalar_lea.vmem %s5, %s302
        $region40: #{tpu_custom_call.1} parent=23 // pred_fallthru
          _
      $region24: #{tpu_custom_call.1} parent=5 // pred_fallthru
        _
      %p304 = scmp.le.s32.totalorder 1, %s22
      %p305 = scmp.lt.s32.totalorder %s22, 3
      %p306 = pnand %p304, %p305
      %p307 = pneg %p306
      // Predicated region
      $region41: #{tpu_custom_call.1} parent=5 // pred_check
        _
      $region42: #{tpu_custom_call.1} parent=5 // pred_check_branch
        %309 = sbr.rel (%p306) target = $region44
      $region43: #{tpu_custom_call.1} parent=5 // pred_region
        %s310 = ssub.s32 %s22, 1
        %s311 = sand.u32 %s49, 1
        %s312 = scalar_lea.sflag [#allocation3], %s311
        %s313 = sand.u32 %s49, 1
        %s314 = smul.addr %s313, 8
        %s315 = scalar_lea.vmem [#allocation2], %s314
        // Predicated region
        $region45: #{tpu_custom_call.1} parent=43 // pred_check
          %p316 = pneg %p62
        $region46: #{tpu_custom_call.1} parent=43 // pred_check_branch
          %318 = sbr.rel (%p316) target = $region48
        $region47: #{tpu_custom_call.1} parent=43 // pred_region
          %319 = dma.done %s312, 128
        $region48: #{tpu_custom_call.1} parent=43 // pred_fallthru
          _
        // Predicated region
        $region49: #{tpu_custom_call.1} parent=43 // pred_check
          %p320 = pneg %p83
        $region50: #{tpu_custom_call.1} parent=43 // pred_check_branch
          %322 = sbr.rel (%p320) target = $region52
        $region51: #{tpu_custom_call.1} parent=43 // pred_region
          %323 = dma.done [#allocation6], 16
        $region52: #{tpu_custom_call.1} parent=43 // pred_fallthru
          _
        // Predicated region
        $region53: #{tpu_custom_call.1} parent=43 // pred_check
          %p324 = pneg %p104
        $region54: #{tpu_custom_call.1} parent=43 // pred_check_branch
          %326 = sbr.rel (%p324) target = $region56
        $region55: #{tpu_custom_call.1} parent=43 // pred_region
          %327 = dma.done [#allocation6], 16
        $region56: #{tpu_custom_call.1} parent=43 // pred_fallthru
          _
        %s328 = sand.u32 %s119, 1
        %s329 = scalar_lea.sflag [#allocation9], %s328
        %s330 = sand.u32 %s119, 1
        %s331 = smul.addr %s330, 8
        %s332 = scalar_lea.vmem [#allocation8], %s331
        // Predicated region
        $region57: #{tpu_custom_call.1} parent=43 // pred_check
          %p333 = pneg %p132
        $region58: #{tpu_custom_call.1} parent=43 // pred_check_branch
          %335 = sbr.rel (%p333) target = $region60
        $region59: #{tpu_custom_call.1} parent=43 // pred_region
          %336 = dma.done %s329, 128
        $region60: #{tpu_custom_call.1} parent=43 // pred_fallthru
          _
        %s337 = sand.u32 %s49, 1
        %s338 = scalar_lea.sflag [#allocation3], %s337
        %s339 = sand.u32 %s49, 1
        %s340 = smul.addr %s339, 8
        %s341 = scalar_lea.vmem [#allocation2], %s340
        %p342 = pneg %p62
        %p343 = pneg %p59
        %p344 = pneg %p83
        %p345 = pneg %p80
        %p346 = pneg %p104
        %p347 = pneg %p101
        %s348 = sand.u32 %s119, 1
        %s349 = scalar_lea.sflag [#allocation9], %s348
        %s350 = sand.u32 %s119, 1
        %s351 = smul.addr %s350, 8
        %s352 = scalar_lea.vmem [#allocation8], %s351
        %p353 = pneg %p132
        %p354 = pneg %p129
        %p355 = scmp.lt.s32.totalorder %s31, 1
        %s356 = scalar_select %p355, %s31, 1
        %s357 = scalar_lea.vmem %s4, %s356
        %p358 = pneg %p158
        %p359 = pneg %p155
        %p360 = scmp.lt.s32.totalorder %s31, 1
        %s361 = scalar_select %p360, %s31, 1
        %s362 = smul.addr %s361, 8
        %s363 = scalar_lea.vmem %s5, %s362
        %p364 = pneg %p184
        %p365 = pneg %p181
        %p366 = pneg %p212
        %p367 = pneg %p209
        %s368 = sand.u32 %s199, 1
        %s369 = scalar_lea.sflag [#allocation4], %s368
        %s370 = sand.u32 %s199, 1
        %s371 = smul.addr %s370, 8
        %s372 = scalar_lea.vmem [#allocation10], %s371
        %p373 = scmp.lt.s32.totalorder %s31, 1
        %s374 = scalar_select %p373, %s31, 1
        %s375 = scalar_lea.vmem %s4, %s374
        %p376 = scmp.lt.s32.totalorder %s31, 1
        %s377 = scalar_select %p376, %s31, 1
        %s378 = smul.addr %s377, 8
        %s379 = scalar_lea.vmem %s5, %s378
        %v380 = vld [vmem:[%s315] sm:$0xff]
        %v381 = vld [vmem:[#allocation5] sm:$0x1]
        %v382 = vld [vmem:[#allocation7] sm:$0x1]
        %vm383 = vcmask 261120
        %v384 = vsel %vm383, %v380, 0.0
        %385 = vadd.xlane.f32.xlu0 %v384
        %v386 = vpop.xlane.xlu0 %385
        %v387 = vrcp.pop 32.0
        %v388 = vmul.f32 %v386, %v387
        %v389 = vsub.f32 %v380, %v388
        %v390 = vmul.f32 %v389, %v389
        %v391 = vsel %vm383, %v390, 0.0
        %392 = vadd.xlane.f32.xlu0 %v391
        %v393 = vpop.xlane.xlu0 %392
        %v394 = vmul.f32 %v393, %v387
        %v395 = vadd.f32 %v394, 1e-05
        %v396 = vrsqrt.pop %v395
        %v397 = vmul.f32 %v389, %v396
        %v399 = vlaneseq
        %v400 = vshrl.u32 %v399, 7
        %v401 = vsub.s32 0, %v400
        %v402 = vrot.slane %v381, %v401
        %v404 = vmul.f32 %v397, %v402
        %v406 = vlaneseq
        %v407 = vshrl.u32 %v406, 7
        %v408 = vsub.s32 0, %v407
        %v409 = vrot.slane %v382, %v408
        %v411 = vadd.f32 %v404, %v409
        %v412 = vld [vmem:[%s332] sm:$0xff]
        %v413 = vld [vmem:[%s375] sm:$0x1]
        %v415 = vlaneseq
        %v416 = vshrl.u32 %v415, 7
        %v417 = vsub.s32 0, %v416
        %v418 = vrot.slane %v413, %v417
        %v420 = vadd.f32 %v412, %v418
        %vm421 = vcmask 64512
        %v422 = vsel %vm421, %v420, -inf
        %423 = vmax.xlane.f32.xlu0 %v422
        %v424 = vpop.xlane.xlu0 %423
        %v425 = vsub.f32 %v420, %v424
        %v426 = vmul.f32 %v425, 1.442695
        %v427 = vpow.pop %v426
        %v428 = vsel %vm421, %v427, 0.0
        %429 = vadd.xlane.f32.xlu0 %v428
        %v430 = vpop.xlane.xlu0 %429
        %v431 = vld [vmem:[%s379] sm:$0xff]
        %v433 = vsel %vm421, %v427, 0
        %435 = vmatprep.subr.mxu0 0.0
        %436 = vmatpush1.msra.mxu0 %v431
        %437 = vmatprep.subr.mxu0 0.0
        %438 = vmatpush1.msra.mxu0 0.0
        %439 = vmatprep.subr.mxu0 0.0
        %440 = vmatpush1.msra.mxu0 0.0
        %441 = vmatprep.subr.mxu0 0.0
        %442 = vmatpush1.msra.mxu0 0.0
        %443 = vmatprep.subr.mxu0 0.0
        %444 = vmatpush1.msra.mxu0 0.0
        %445 = vmatprep.subr.mxu0 0.0
        %446 = vmatpush1.msra.mxu0 0.0
        %447 = vmatprep.subr.mxu0 0.0
        %448 = vmatpush1.msra.mxu0 0.0
        %449 = vmatprep.subr.mxu0 0.0
        %450 = vmatpush1.msra.mxu0 0.0
        %451 = vmatprep.subr.mxu0 0.0
        %452 = vmatpush1.msra.mxu0 0.0
        %453 = vmatprep.subr.mxu0 0.0
        %454 = vmatpush1.msra.mxu0 0.0
        %455 = vmatprep.subr.mxu0 0.0
        %456 = vmatpush1.msra.mxu0 0.0
        %457 = vmatprep.subr.mxu0 0.0
        %458 = vmatpush1.msra.mxu0 0.0
        %459 = vmatprep.subr.mxu0 0.0
        %460 = vmatpush1.msra.mxu0 0.0
        %461 = vmatprep.subr.mxu0 0.0
        %462 = vmatpush1.msra.mxu0 0.0
        %463 = vmatprep.subr.mxu0 0.0
        %464 = vmatpush1.msra.mxu0 0.0
        %465 = vmatprep.subr.mxu0 0.0
        %466 = vmatpush1.msra.mxu0 0.0
        %467 = vmatprep.subr.mxu0 0.0
        %468 = vmatpush1.msra.mxu0 0.0
        %469 = vmatprep.subr.mxu0 0.0
        %470 = vmatpush1.msra.mxu0 0.0
        %471 = vmatprep.subr.mxu0 0.0
        %472 = vmatpush1.msra.mxu0 0.0
        %473 = vmatprep.subr.mxu0 0.0
        %474 = vmatpush1.msra.mxu0 0.0
        %475 = vmatprep.subr.mxu0 0.0
        %476 = vmatpush1.msra.mxu0 0.0
        %477 = vmatprep.subr.mxu0 0.0
        %478 = vmatpush1.msra.mxu0 0.0
        %479 = vmatprep.subr.mxu0 0.0
        %480 = vmatpush1.msra.mxu0 0.0
        %481 = vmatprep.subr.mxu0 0.0
        %482 = vmatpush1.msra.mxu0 0.0
        %483 = vmatprep.subr.mxu0 0.0
        %484 = vmatpush1.msra.mxu0 0.0
        %485 = vmatprep.subr.mxu0 0.0
        %486 = vmatpush1.msra.mxu0 0.0
        %487 = vmatprep.subr.mxu0 0.0
        %488 = vmatpush1.msra.mxu0 0.0
        %489 = vmatprep.subr.mxu0 0.0
        %490 = vmatpush1.msra.mxu0 0.0
        %491 = vmatprep.subr.mxu0 0.0
        %492 = vmatpush1.msra.mxu0 0.0
        %493 = vmatprep.subr.mxu0 0.0
        %494 = vmatpush1.msra.mxu0 0.0
        %495 = vmatprep.subr.mxu0 0.0
        %496 = vmatpush1.msra.mxu0 0.0
        %497 = vmatprep.subr.mxu0 0.0
        %498 = vmatpush1.msra.mxu0 0.0
        %499 = vmatprep.mubr.f32.mxu0 0.0
        %500 = vmatmul.mubr.f32.gmra.mrb[0].mxu0 %v433
        %v501 = vpop.f32.mrb[0].mxu0
        %v502 = vadd.f32 0.0, %v501
        %v503 = vpop.f32.mrb[0].mxu0
        %504 = vdwg.mxu0
        %v505 = vrcp.pop %v430
        %v506 = vmul.f32 1.0, %v505
        %v507 = vmul.f32 %v502, %v506
        %v508 = vadd.f32 %v411, %v507
        %509 = vst.msk [vmem:[%s372] sm:$0xff] %vm383, %v508
        %s510 = sand.u32 %s199, 1
        %s511 = scalar_lea.sflag [#allocation4], %s510
        %s512 = sand.u32 %s199, 1
        %s513 = smul.addr %s512, 8
        %s514 = scalar_lea.vmem [#allocation10], %s513
        // Predicated region
        $region61: #{tpu_custom_call.1} parent=43 // pred_check
          %p515 = pneg %p209
        $region62: #{tpu_custom_call.1} parent=43 // pred_check_branch
          %517 = sbr.rel (%p515) target = $region64
        $region63: #{tpu_custom_call.1} parent=43 // pred_region
          %s519 = ssub.s32 128, 128
          %520 = vsyncadd %s511, %s519
          %s521 = sadd.s32 %s32, %s31
          %s522 = smul.addr %s521, 128
          %s523 = scalar_lea.hbm %s6, %s522
          %s525 = sshll.u32 %s514, 4
          %s526 = int_to_ptr.vmem [resolvable:$true] %s525
          %528 = dma.vmem_to_hbm [thread:$0]  %s526, 128, %s523, %s511
        $region64: #{tpu_custom_call.1} parent=43 // pred_fallthru
          _
      $region44: #{tpu_custom_call.1} parent=5 // pred_fallthru
        _
      %p529 = scmp.le.s32.totalorder 2, %s22
      // Predicated region
      $region65: #{tpu_custom_call.1} parent=5 // pred_check
        %p530 = pneg %p529
      $region66: #{tpu_custom_call.1} parent=5 // pred_check_branch
        %532 = sbr.rel (%p530) target = $region68
      $region67: #{tpu_custom_call.1} parent=5 // pred_region
        %s533 = ssub.s32 %s22, 2
        // Predicated region
        $region69: #{tpu_custom_call.1} parent=67 // pred_check
          %p534 = pneg %p215
        $region70: #{tpu_custom_call.1} parent=67 // pred_check_branch
          %536 = sbr.rel (%p534) target = $region72
        $region71: #{tpu_custom_call.1} parent=67 // pred_region
          %s537 = sand.u32 %s200, 1
          %s538 = scalar_lea.sflag [#allocation4], %s537
          %s539 = sand.u32 %s200, 1
          %s540 = smul.addr %s539, 8
          %s541 = scalar_lea.vmem [#allocation10], %s540
          %542 = dma.done %s538, 128
        $region72: #{tpu_custom_call.1} parent=67 // pred_fallthru
          _
      $region68: #{tpu_custom_call.1} parent=5 // pred_fallthru
        _
    $region6: #{tpu_custom_call.1} parent=1 // loop_footer
      %s26 = sadd.s32 1, %s22
    $region7: #{tpu_custom_call.1} parent=1 // loop_footer_branch
      %21 = sbr.rel target = $region3
    $region8: #{tpu_custom_call.1} parent=1 // loop_exit
      _
    %543 = vsyncpa [#allocation3], 1
    %s544 = scalar_lea.sflag [#allocation3], 1
    %545 = vsyncpa %s544, 1
    %546 = vsyncpa [#allocation6], 1
    %547 = vsyncpa [#allocation9], 1
    %s548 = scalar_lea.sflag [#allocation9], 1
    %549 = vsyncpa %s548, 1
    %550 = vsyncpa [#allocation4], 1
    %s551 = scalar_lea.sflag [#allocation4], 1
    %552 = vsyncpa %s551, 1

</llo_original>
